<compile_context>
chip_gen: v5e
topology: v5e:2x2
jax: 0.10.0
libtpu: 0.0.40
codegen_flags: <defaults>
</compile_context>

<pallas_src>
import numpy as np
import jax
import jax.numpy as jnp
from jax.experimental import pallas as pl
from jax.experimental.pallas import tpu as pltpu


# ----------------------------- Pallas kernel ------------------------------ #
def _conv11_kernel(x_ref, w1_ref, sh1_ref, w2_ref, sh2_ref, o_ref):
    w1 = w1_ref[...]                                   # (Cmid, Cin)
    sh1 = sh1_ref[...]                                 # (Cmid, 1)
    w2 = w2_ref[...]                                   # (Cout, Cmid)
    sh2 = sh2_ref[...]                                 # (Cout, 1)

    # Statically unrolled over the (small) batch block: each image is a
    # (Cout,Cin)@(Cin,TS) MXU dot + per-channel shift + ReLU, twice.  The
    # lane axis (TS) stays dense -> unmasked vst on the output.
    for b in range(x_ref.shape[0]):
        x = x_ref[b].astype(jnp.float32)                                  # (Cin, TS)
        y = jnp.dot(w1, x, preferred_element_type=jnp.float32) + sh1      # (Cmid, TS)
        y = jnp.maximum(y, 0.0)
        z = jnp.dot(w2, y, preferred_element_type=jnp.float32) + sh2      # (Cout, TS)
        o_ref[b] = jnp.maximum(z, 0.0).astype(o_ref.dtype)


# ------------------------------ tiling logic ------------------------------- #
def _round_up(x, m):
    return ((x + m - 1) // m) * m


def _choose_tiling(B, HW, cin, cmid, cout, io_bytes):
    """Pick (batch_block, spatial_tile, spatial_tiles) for the (B, C, HW) layout.

    Targets ~2 MiB of HBM traffic per grid step, keeps the double-buffered,
    sublane-padded working set under a conservative VMEM budget, and keeps
    the total grid >= 2 steps so both v7x TensorCores are used.
    """
    cin_p, cmid_p, cout_p = (_round_up(c, 8) for c in (cin, cmid, cout))

    # VMEM per lane per image: double-buffered x/out DMA tiles (io dtype)
    # + f32 intermediates (y and z), all padded to 8 sublanes.
    per_lane_vmem = 2 * (cin_p + cout_p) * io_bytes + 2 * cmid_p * 4
    # HBM traffic per lane per image (un-padded: what we actually move).
    per_lane_hbm = (cin + cout) * io_bytes

    vmem_budget = 24 << 20           # headroom under the 32 MiB scoped default
    target_step = 2 << 20            # ~2 MiB of HBM traffic per grid step

    # --- spatial tile: multiple of 128 (or full HW when HW < 128) ---
    if HW < 128:
        ts = HW                                          # full-dim block (legal)
    else:
        lanes_vmem = max(128, (vmem_budget // per_lane_vmem) // 128 * 128)
        lanes_tgt = max(128, (target_step // per_lane_hbm) // 128 * 128)
        ts = max(128, min((HW // 128) * 128, lanes_vmem, lanes_tgt, 65536))
        # Single image + single tile would leave one TC idle on v7x: split.
        if B == 1 and -(-HW // ts) == 1 and HW > 128:
            ts = max(128, _round_up((HW + 1) // 2, 128))
    s_tiles = -(-HW // ts)

    # --- batch block: largest divisor of B that fits VMEM, keeps >= 2 grid
    # steps (when the problem allows), and does not grossly overshoot the
    # per-step traffic target ---
    bblk = 1
    for cand in range(B, 0, -1):
        if B % cand:
            continue
        if cand * ts * per_lane_vmem > vmem_budget:
            continue
        if (B // cand) * s_tiles < min(2, B * s_tiles):
            continue
        if cand == 1 or cand * ts * per_lane_hbm <= 2 * target_step:
            bblk = cand
            break
    return bblk, ts, s_tiles


# ------------------------------ wrapper ----------------------------------- #
def conv11_block_pallas(x_nchw, folded, io_dtype=jnp.float32):
    B, Cin, H, W = x_nchw.shape
    HW = H * W
    Cmid = folded["w1"].shape[0]
    Cout = folded["w2"].shape[0]
    io_bytes = jnp.dtype(io_dtype).itemsize

    # NCHW -> (B, C, H*W): a pure reshape; data stays channel-major with the
    # spatial (lane) axis last and lane-dense.
    x = x_nchw.reshape(B, Cin, HW).astype(io_dtype)

    bblk, ts, s_tiles = _choose_tiling(B, HW, Cin, Cmid, Cout, io_bytes)
    grid = (B // bblk, s_tiles)

    params = [folded["w1"], folded["sh1"], folded["w2"], folded["sh2"]]

    in_specs = [pl.BlockSpec((bblk, Cin, ts), lambda b, s: (b, 0, s))]
    in_specs += [pl.BlockSpec(p.shape, lambda b, s: (0, 0)) for p in params]
    out_spec = pl.BlockSpec((bblk, Cout, ts), lambda b, s: (b, 0, s))

    flops = 2 * B * HW * (Cin * Cmid + Cmid * Cout)
    bytes_accessed = (io_bytes * (int(x.size) + B * Cout * HW)
                      + 4 * sum(int(p.size) for p in params))
    cost = pl.CostEstimate(flops=int(flops), transcendentals=0,
                           bytes_accessed=int(bytes_accessed))

    # Sublane-padded, double-buffered VMEM estimate (matches _choose_tiling).
    cin_p, cmid_p, cout_p = (_round_up(c, 8) for c in (Cin, Cmid, Cout))
    est = bblk * ts * (2 * (cin_p + cout_p) * io_bytes + 2 * cmid_p * 4)
    vmem_limit = int(min(32 << 20, max(16 << 20, 2 * est)))

    out = pl.pallas_call(
        _conv11_kernel,
        out_shape=jax.ShapeDtypeStruct((B, Cout, HW), io_dtype),
        grid=grid,
        in_specs=in_specs,
        out_specs=out_spec,
        compiler_params=pltpu.CompilerParams(
            dimension_semantics=("parallel", "parallel"),
            vmem_limit_bytes=vmem_limit),
        cost_estimate=cost,
    )(x, *params)

    return out.reshape(B, Cout, H, W)


# ------------------------- deterministic params ---------------------------- #
def make_params(key, in_ch):
    mid = 2 * in_ch
    ks = jax.random.split(key, 12)

    def n(i, shape, s=0.2):
        return (s * jax.random.normal(ks[i], shape)).astype(jnp.float32)

    return dict(
        # net[0]: Conv2d(in_ch, 2*in_ch, 1)  + net[1]: BatchNorm2d(2*in_ch)
        w1=n(0, (mid, in_ch)), b1=n(1, (mid,)),
        g1=(1.0 + n(2, (mid,), 0.1)), beta1=n(3, (mid,)),
        mean1=n(4, (mid,)), var1=(1.0 + jnp.abs(n(5, (mid,), 0.3))),
        # net[3]: Conv2d(2*in_ch, in_ch, 1)  + net[4]: BatchNorm2d(in_ch)
        w2=n(6, (in_ch, mid)), b2=n(7, (in_ch,)),
        g2=(1.0 + n(8, (in_ch,), 0.1)), beta2=n(9, (in_ch,)),
        mean2=n(10, (in_ch,)), var2=(1.0 + jnp.abs(n(11, (in_ch,), 0.3))),
    )


def fold_params(raw, eps=1e-5):
    # Fold eval-mode BN (and the conv bias) into the conv weight and a
    # per-channel shift:  BN(Wx + b) = (s*W)x + ((b - mean)*s + beta).
    s1 = raw["g1"] / jnp.sqrt(raw["var1"] + eps)
    s2 = raw["g2"] / jnp.sqrt(raw["var2"] + eps)
    return dict(
        w1=(raw["w1"] * s1[:, None]).astype(jnp.float32),
        sh1=((raw["b1"] - raw["mean1"]) * s1 + raw["beta1"])[:, None]
            .astype(jnp.float32),
        w2=(raw["w2"] * s2[:, None]).astype(jnp.float32),
        sh2=((raw["b2"] - raw["mean2"]) * s2 + raw["beta2"])[:, None]
            .astype(jnp.float32),
    )


# -------------------------- pure-JAX reference ----------------------------- #
def reference_forward(x, raw, eps=1e-5):
    def conv1x1(v, w, b):
        return jnp.einsum("bchw,oc->bohw", v, w) + b[None, :, None, None]

    def bn(v, g, beta, mean, var):
        return ((v - mean[None, :, None, None])
                / jnp.sqrt(var[None, :, None, None] + eps)
                * g[None, :, None, None] + beta[None, :, None, None])

    y = jax.nn.relu(bn(conv1x1(x, raw["w1"], raw["b1"]),
                       raw["g1"], raw["beta1"], raw["mean1"], raw["var1"]))
    y = jax.nn.relu(bn(conv1x1(y, raw["w2"], raw["b2"]),
                       raw["g2"], raw["beta2"], raw["mean2"], raw["var2"]))
    return y


# --------------------------------- main ------------------------------------ #
if __name__ == "__main__":
    B, in_ch, H, W = 2, 4, 16, 16     # x: (2, 4, 16, 16), HW = 256 lanes

    key = jax.random.PRNGKey(0)
    k_x, k_p = jax.random.split(key)
    x = jax.random.normal(k_x, (B, in_ch, H, W), dtype=jnp.float32)

    raw = make_params(k_p, in_ch)
    folded = fold_params(raw)

    out = jax.block_until_ready(conv11_block_pallas(x, folded))
    ref = jax.block_until_ready(reference_forward(x, raw))

    np.testing.assert_allclose(np.asarray(out), np.asarray(ref),
                               rtol=1e-4, atol=1e-4)
    print("KERNEL_OK")
</pallas_src>

<mosaic_0001>
module attributes {stable_mosaic.version = 11 : i64} {
  func.func @_conv11_kernel(%arg0: i32, %arg1: i32, %arg2: memref<1x4x256xf32, #tpu.memory_space<vmem>>, %arg3: memref<8x4xf32, #tpu.memory_space<vmem>>, %arg4: memref<8x1xf32, #tpu.memory_space<vmem>>, %arg5: memref<4x8xf32, #tpu.memory_space<vmem>>, %arg6: memref<4x1xf32, #tpu.memory_space<vmem>>, %arg7: memref<1x4x256xf32, #tpu.memory_space<vmem>>) attributes {dimension_semantics = [#tpu.dimension_semantics<parallel>, #tpu.dimension_semantics<parallel>], iteration_bounds = array<i64: 2, 1>, scalar_prefetch = 0 : i64, scratch_operands = 0 : i64, tpu.core_type = #tpu.core_type<tc>, window_params = [{transform_indices = @transform_0, window_bounds = array<i64: 1, 4, 256>}, {pipeline_mode = #tpu.pipeline_mode<synchronous>, transform_indices = @transform_1, window_bounds = array<i64: 8, 4>}, {pipeline_mode = #tpu.pipeline_mode<synchronous>, transform_indices = @transform_2, window_bounds = array<i64: 8, 1>}, {pipeline_mode = #tpu.pipeline_mode<synchronous>, transform_indices = @transform_3, window_bounds = array<i64: 4, 8>}, {pipeline_mode = #tpu.pipeline_mode<synchronous>, transform_indices = @transform_4, window_bounds = array<i64: 4, 1>}, {transform_indices = @transform_5, window_bounds = array<i64: 1, 4, 256>}]} {
    %c0 = arith.constant 0 : index
    %c0_0 = arith.constant 0 : index
    %0 = vector.load %arg3[%c0, %c0_0] : memref<8x4xf32, #tpu.memory_space<vmem>>, vector<8x4xf32>
    %c0_1 = arith.constant 0 : index
    %c0_2 = arith.constant 0 : index
    %1 = vector.load %arg4[%c0_1, %c0_2] : memref<8x1xf32, #tpu.memory_space<vmem>>, vector<8x1xf32>
    %c0_3 = arith.constant 0 : index
    %c0_4 = arith.constant 0 : index
    %2 = vector.load %arg5[%c0_3, %c0_4] : memref<4x8xf32, #tpu.memory_space<vmem>>, vector<4x8xf32>
    %c0_5 = arith.constant 0 : index
    %c0_6 = arith.constant 0 : index
    %3 = vector.load %arg6[%c0_5, %c0_6] : memref<4x1xf32, #tpu.memory_space<vmem>>, vector<4x1xf32>
    %c0_7 = arith.constant 0 : index
    %c0_8 = arith.constant 0 : index
    %c0_9 = arith.constant 0 : index
    %4 = vector.load %arg2[%c0_7, %c0_8, %c0_9] : memref<1x4x256xf32, #tpu.memory_space<vmem>>, vector<1x4x256xf32>
    %5 = vector.shape_cast %4 : vector<1x4x256xf32> to vector<4x256xf32>
    %cst = arith.constant dense<0.000000e+00> : vector<8x256xf32>
    %6 = tpu.matmul %0, %5, %cst {dimension_numbers = #tpu.dot_dimension_numbers<[1], [0], [0], [1], [0, 0, 1, 1], [], []>} : vector<8x4xf32>, vector<4x256xf32>, vector<8x256xf32> -> vector<8x256xf32>
    %7 = vector.broadcast %1 : vector<8x1xf32> to vector<8x256xf32>
    %8 = arith.addf %6, %7 : vector<8x256xf32>
    %cst_10 = arith.constant 0.000000e+00 : f32
    %9 = vector.broadcast %cst_10 : f32 to vector<8x256xf32>
    %10 = arith.maximumf %8, %9 : vector<8x256xf32>
    %cst_11 = arith.constant dense<0.000000e+00> : vector<4x256xf32>
    %11 = tpu.matmul %2, %10, %cst_11 {dimension_numbers = #tpu.dot_dimension_numbers<[1], [0], [0], [1], [0, 0, 1, 1], [], []>} : vector<4x8xf32>, vector<8x256xf32>, vector<4x256xf32> -> vector<4x256xf32>
    %12 = vector.broadcast %3 : vector<4x1xf32> to vector<4x256xf32>
    %13 = arith.addf %11, %12 : vector<4x256xf32>
    %cst_12 = arith.constant 0.000000e+00 : f32
    %14 = vector.broadcast %cst_12 : f32 to vector<4x256xf32>
    %15 = arith.maximumf %13, %14 : vector<4x256xf32>
    %c0_13 = arith.constant 0 : index
    %c0_14 = arith.constant 0 : index
    %c0_15 = arith.constant 0 : index
    %16 = vector.load %arg7[%c0_13, %c0_14, %c0_15] : memref<1x4x256xf32, #tpu.memory_space<vmem>>, vector<1x4x256xf32>
    %17 = vector.shape_cast %16 : vector<1x4x256xf32> to vector<4x256xf32>
    %18 = vector.shape_cast %15 : vector<4x256xf32> to vector<1x4x256xf32>
    tpu.vector_store %arg7[%c0_13, %c0_14, %c0_15], %18 {strides = array<i32>} : memref<1x4x256xf32, #tpu.memory_space<vmem>>, vector<1x4x256xf32>,
    return
  }
  func.func @transform_0(%arg0: i32, %arg1: i32) -> (i32, i32, i32) {
    %c0_i32 = arith.constant 0 : i32
    %c0_i32_0 = arith.constant 0 : i32
    return %arg0, %c0_i32, %arg1 : i32, i32, i32
  }
  func.func @transform_1(%arg0: i32, %arg1: i32) -> (i32, i32) {
    %c0_i32 = arith.constant 0 : i32
    %c0_i32_0 = arith.constant 0 : i32
    %c0_i32_1 = arith.constant 0 : i32
    return %c0_i32, %c0_i32_0 : i32, i32
  }
  func.func @transform_2(%arg0: i32, %arg1: i32) -> (i32, i32) {
    %c0_i32 = arith.constant 0 : i32
    %c0_i32_0 = arith.constant 0 : i32
    %c0_i32_1 = arith.constant 0 : i32
    return %c0_i32, %c0_i32_0 : i32, i32
  }
  func.func @transform_3(%arg0: i32, %arg1: i32) -> (i32, i32) {
    %c0_i32 = arith.constant 0 : i32
    %c0_i32_0 = arith.constant 0 : i32
    %c0_i32_1 = arith.constant 0 : i32
    return %c0_i32, %c0_i32_0 : i32, i32
  }
  func.func @transform_4(%arg0: i32, %arg1: i32) -> (i32, i32) {
    %c0_i32 = arith.constant 0 : i32
    %c0_i32_0 = arith.constant 0 : i32
    %c0_i32_1 = arith.constant 0 : i32
    return %c0_i32, %c0_i32_0 : i32, i32
  }
  func.func @transform_5(%arg0: i32, %arg1: i32) -> (i32, i32, i32) {
    %c0_i32 = arith.constant 0 : i32
    %c0_i32_0 = arith.constant 0 : i32
    return %arg0, %c0_i32, %arg1 : i32, i32, i32
  }
}

</mosaic_0001>

<llo_original>
// kernel: tpu_custom_call.1
$region0: #{tpu_custom_call.1}
  #allocation0 [shape = 'u32[]', space=smem, size = 0x4, offset = 0x4, fixed_abs, tag = 'smem constant byte address 0x4 - core index']
  #allocation1 [shape = 'u32[72,128]{1,0:T(1,128)}', space=vmem, size = 0x9000, scoped, tag = 'internal scratch']
  %s0 = inlined_call_operand.vmem [shape: f32[2,4,256], index: 0, kind: input, shape index: {}]
  %s1 = inlined_call_operand.vmem [shape: f32[8,4], index: 1, kind: input, shape index: {}]
  %s2 = inlined_call_operand.vmem [shape: f32[8,1], index: 2, kind: input, shape index: {}]
  %s3 = inlined_call_operand.vmem [shape: f32[4,8], index: 3, kind: input, shape index: {}]
  %s4 = inlined_call_operand.vmem [shape: f32[4,1], index: 4, kind: input, shape index: {}]
  %s5 = inlined_call_operand.hbm [shape: f32[2,4,256], index: 5, kind: output, shape index: {}]
  %s6 = sld [smem:[#allocation0]]
  $region53: #{tpu_custom_call.1} parent=0
    _
  %s8 = ssub.s32 1, %s6
  %s9 = scalar_select 0, %s8, %s6
  $region1: #{tpu_custom_call.1} parent=0
    #allocation2 [shape = 'u8[8192]{0}', space=vmem, size = 0x2000, scoped, tag = 'output window, operand 0']
    #allocation3 [shape = 's32[2]{0}', space=sflag, size = 0x8, scoped, tag = 'scoped memory for tpu_custom_call.1']
    %10 = vsyncpa [#allocation3], 0
    %s11 = scalar_lea.sflag [#allocation3], 1
    %12 = vsyncpa %s11, 0
    loop: start=0, step=1, limit=4
    $region2: #{tpu_custom_call.1} parent=1 // loop_pre_header
      _
    $region3: #{tpu_custom_call.1} parent=1 // loop_header
      %s14 = sphi 0, %s18
      %p15 = scmp.ge.s32.totalorder %s14, 4
      %s21 = sphi 0, %s33
      %s22 = sphi 0, %s29
      %s23 = sphi 0, %s21
      %s24 = sphi 0, %s22
      %s25 = sphi 0, %s23
      %s26 = sphi 0, %s24
      %s38 = sphi 0, %s40
      %s41 = sphi 0, %s38
      %s42 = sphi 0, %s41
      %s58 = sphi 0, %s42
      %s62 = sphi 0, %s62
      %s64 = sphi 0, %s62
      %s65 = sphi 0, %s64
      %s79 = sphi 0, %s65
      %s83 = sphi 0, %s83
      %s85 = sphi 0, %s83
      %s86 = sphi 0, %s85
      %s100 = sphi 0, %s86
      %s104 = sphi 0, %s104
      %s106 = sphi 0, %s104
      %s107 = sphi 0, %s106
      %s121 = sphi 0, %s107
      %s125 = sphi 0, %s125
      %s127 = sphi 0, %s125
      %s128 = sphi 0, %s127
      %s142 = sphi 0, %s128
      %s150 = sphi 0, %s152
      %s153 = sphi 0, %s150
      %s154 = sphi 0, %s153
      %s170 = sphi 0, %s154
    $region4: #{tpu_custom_call.1} parent=1 // loop_header_branch
      %17 = sbr.rel (%p15) target = $region8
    $region5: #{tpu_custom_call.1} parent=1 // loop_body
      %s19 = ssub.s32 %s14, 1
      %s20 = ssub.s32 %s14, 2
      %s27 = sadd.s32 1, %s22
      %p28 = scmp.ge.s32.totalorder %s27, 1
      %s29 = scalar_select %p28, 0, %s27
      %s30 = sadd.s32 1, %s21
      %s31 = scalar_select %p28, %s30, %s21
      %p32 = scmp.ge.s32.totalorder %s31, 2
      %s33 = scalar_select %p32, 0, %s31
      %s34 = ssub.s32 %s21, %s33
      %s35 = ssub.s32 %s22, %s29
      %s36 = sor.u32 %s34, %s35
      %p37 = scmp.eq.s32.totalorder %s36, 0
      %s39 = sadd.s32 %s38, 1
      %s40 = scalar_select %p37, %s38, %s39
      %p43 = pneg %p37
      %p44 = scmp.eq.s32.totalorder %s14, 1
      %p45 = por %p43, %p44
      %p46 = scmp.ne.s32.totalorder %s38, %s41
      %p47 = scmp.eq.s32.totalorder %s14, 0
      %p48 = por %p46, %p47
      %p49 = scmp.ne.s32.totalorder %s38, %s41
      %p50 = scmp.eq.s32.totalorder %s19, 1
      %p51 = por %p49, %p50
      %p52 = scmp.ne.s32.totalorder %s41, %s42
      %p53 = scmp.eq.s32.totalorder %s19, 0
      %p54 = por %p52, %p53
      %p55 = scmp.ne.s32.totalorder %s41, %s42
      %p56 = scmp.eq.s32.totalorder %s20, 1
      %p57 = por %p55, %p56
      %p59 = scmp.ne.s32.totalorder %s42, %s58
      %p60 = scmp.eq.s32.totalorder %s20, 0
      %p61 = por %p59, %p60
      %s63 = sadd.s32 %s62, 1
      %p66 = scmp.eq.s32.totalorder %s14, 1
      %p67 = scmp.ne.s32.totalorder %s62, %s64
      %p68 = scmp.eq.s32.totalorder %s14, 0
      %p69 = por %p67, %p68
      %p70 = scmp.ne.s32.totalorder %s62, %s64
      %p71 = scmp.eq.s32.totalorder %s19, 1
      %p72 = por %p70, %p71
      %p73 = scmp.ne.s32.totalorder %s64, %s65
      %p74 = scmp.eq.s32.totalorder %s19, 0
      %p75 = por %p73, %p74
      %p76 = scmp.ne.s32.totalorder %s64, %s65
      %p77 = scmp.eq.s32.totalorder %s20, 1
      %p78 = por %p76, %p77
      %p80 = scmp.ne.s32.totalorder %s65, %s79
      %p81 = scmp.eq.s32.totalorder %s20, 0
      %p82 = por %p80, %p81
      %s84 = sadd.s32 %s83, 1
      %p87 = scmp.eq.s32.totalorder %s14, 1
      %p88 = scmp.ne.s32.totalorder %s83, %s85
      %p89 = scmp.eq.s32.totalorder %s14, 0
      %p90 = por %p88, %p89
      %p91 = scmp.ne.s32.totalorder %s83, %s85
      %p92 = scmp.eq.s32.totalorder %s19, 1
      %p93 = por %p91, %p92
      %p94 = scmp.ne.s32.totalorder %s85, %s86
      %p95 = scmp.eq.s32.totalorder %s19, 0
      %p96 = por %p94, %p95
      %p97 = scmp.ne.s32.totalorder %s85, %s86
      %p98 = scmp.eq.s32.totalorder %s20, 1
      %p99 = por %p97, %p98
      %p101 = scmp.ne.s32.totalorder %s86, %s100
      %p102 = scmp.eq.s32.totalorder %s20, 0
      %p103 = por %p101, %p102
      %s105 = sadd.s32 %s104, 1
      %p108 = scmp.eq.s32.totalorder %s14, 1
      %p109 = scmp.ne.s32.totalorder %s104, %s106
      %p110 = scmp.eq.s32.totalorder %s14, 0
      %p111 = por %p109, %p110
      %p112 = scmp.ne.s32.totalorder %s104, %s106
      %p113 = scmp.eq.s32.totalorder %s19, 1
      %p114 = por %p112, %p113
      %p115 = scmp.ne.s32.totalorder %s106, %s107
      %p116 = scmp.eq.s32.totalorder %s19, 0
      %p117 = por %p115, %p116
      %p118 = scmp.ne.s32.totalorder %s106, %s107
      %p119 = scmp.eq.s32.totalorder %s20, 1
      %p120 = por %p118, %p119
      %p122 = scmp.ne.s32.totalorder %s107, %s121
      %p123 = scmp.eq.s32.totalorder %s20, 0
      %p124 = por %p122, %p123
      %s126 = sadd.s32 %s125, 1
      %p129 = scmp.eq.s32.totalorder %s14, 1
      %p130 = scmp.ne.s32.totalorder %s125, %s127
      %p131 = scmp.eq.s32.totalorder %s14, 0
      %p132 = por %p130, %p131
      %p133 = scmp.ne.s32.totalorder %s125, %s127
      %p134 = scmp.eq.s32.totalorder %s19, 1
      %p135 = por %p133, %p134
      %p136 = scmp.ne.s32.totalorder %s127, %s128
      %p137 = scmp.eq.s32.totalorder %s19, 0
      %p138 = por %p136, %p137
      %p139 = scmp.ne.s32.totalorder %s127, %s128
      %p140 = scmp.eq.s32.totalorder %s20, 1
      %p141 = por %p139, %p140
      %p143 = scmp.ne.s32.totalorder %s128, %s142
      %p144 = scmp.eq.s32.totalorder %s20, 0
      %p145 = por %p143, %p144
      %s146 = ssub.s32 %s21, %s33
      %s147 = ssub.s32 %s22, %s29
      %s148 = sor.u32 %s146, %s147
      %p149 = scmp.eq.s32.totalorder %s148, 0
      %s151 = sadd.s32 %s150, 1
      %s152 = scalar_select %p149, %s150, %s151
      %p155 = pneg %p149
      %p156 = scmp.eq.s32.totalorder %s14, 1
      %p157 = por %p155, %p156
      %p158 = scmp.ne.s32.totalorder %s150, %s153
      %p159 = scmp.eq.s32.totalorder %s14, 0
      %p160 = por %p158, %p159
      %p161 = scmp.ne.s32.totalorder %s150, %s153
      %p162 = scmp.eq.s32.totalorder %s19, 1
      %p163 = por %p161, %p162
      %p164 = scmp.ne.s32.totalorder %s153, %s154
      %p165 = scmp.eq.s32.totalorder %s19, 0
      %p166 = por %p164, %p165
      %p167 = scmp.ne.s32.totalorder %s153, %s154
      %p168 = scmp.eq.s32.totalorder %s20, 1
      %p169 = por %p167, %p168
      %p171 = scmp.ne.s32.totalorder %s154, %s170
      %p172 = scmp.eq.s32.totalorder %s20, 0
      %p173 = por %p171, %p172
      %p174 = scmp.le.s32.totalorder 1, %s14
      %p175 = scmp.lt.s32.totalorder %s14, 3
      %p176 = pnand %p174, %p175
      %p177 = pneg %p176
      // Predicated region
      $region9: #{tpu_custom_call.1} parent=5 // pred_check
        _
      $region10: #{tpu_custom_call.1} parent=5 // pred_check_branch
        %179 = sbr.rel (%p176) target = $region12
      $region11: #{tpu_custom_call.1} parent=5 // pred_region
        %s180 = ssub.s32 %s14, 1
        // Predicated region
        $region13: #{tpu_custom_call.1} parent=11 // pred_check
          %p181 = pneg %p75
        $region14: #{tpu_custom_call.1} parent=11 // pred_check_branch
          %183 = sbr.rel (%p181) target = $region16
        $region15: #{tpu_custom_call.1} parent=11 // pred_region
          _
        $region16: #{tpu_custom_call.1} parent=11 // pred_fallthru
          _
        // Predicated region
        $region17: #{tpu_custom_call.1} parent=11 // pred_check
          %p184 = pneg %p96
        $region18: #{tpu_custom_call.1} parent=11 // pred_check_branch
          %186 = sbr.rel (%p184) target = $region20
        $region19: #{tpu_custom_call.1} parent=11 // pred_region
          _
        $region20: #{tpu_custom_call.1} parent=11 // pred_fallthru
          _
        // Predicated region
        $region21: #{tpu_custom_call.1} parent=11 // pred_check
          %p187 = pneg %p117
        $region22: #{tpu_custom_call.1} parent=11 // pred_check_branch
          %189 = sbr.rel (%p187) target = $region24
        $region23: #{tpu_custom_call.1} parent=11 // pred_region
          _
        $region24: #{tpu_custom_call.1} parent=11 // pred_fallthru
          _
        // Predicated region
        $region25: #{tpu_custom_call.1} parent=11 // pred_check
          %p190 = pneg %p138
        $region26: #{tpu_custom_call.1} parent=11 // pred_check_branch
          %192 = sbr.rel (%p190) target = $region28
        $region27: #{tpu_custom_call.1} parent=11 // pred_region
          _
        $region28: #{tpu_custom_call.1} parent=11 // pred_fallthru
          _
      $region12: #{tpu_custom_call.1} parent=5 // pred_fallthru
        _
      %p193 = scmp.lt.s32.totalorder %s14, 2
      // Predicated region
      $region29: #{tpu_custom_call.1} parent=5 // pred_check
        %p194 = pneg %p193
      $region30: #{tpu_custom_call.1} parent=5 // pred_check_branch
        %196 = sbr.rel (%p194) target = $region32
      $region31: #{tpu_custom_call.1} parent=5 // pred_region
        // Predicated region
        $region33: #{tpu_custom_call.1} parent=31 // pred_check
          %p197 = pneg %p48
        $region34: #{tpu_custom_call.1} parent=31 // pred_check_branch
          %199 = sbr.rel (%p197) target = $region36
        $region35: #{tpu_custom_call.1} parent=31 // pred_region
          %s200 = smul.u32 2, %s22
          %p201 = scmp.lt.s32.totalorder %s21, 1
          %s202 = scalar_select %p201, %s21, 1
          %p203 = scmp.lt.s32.totalorder %s200, 1
          %s204 = scalar_select %p203, %s200, 1
          %s205 = smul.addr %s202, 2
          %s206 = sadd.s32 %s204, %s205
          %s207 = smul.addr %s206, 4
          %s208 = scalar_lea.vmem %s0, %s207
          %s209 = smul.u32 2, %s22
        $region36: #{tpu_custom_call.1} parent=31 // pred_fallthru
          _
      $region32: #{tpu_custom_call.1} parent=5 // pred_fallthru
        _
      %p210 = scmp.le.s32.totalorder 1, %s14
      %p211 = scmp.lt.s32.totalorder %s14, 3
      %p212 = pnand %p210, %p211
      %p213 = pneg %p212
      // Predicated region
      $region37: #{tpu_custom_call.1} parent=5 // pred_check
        _
      $region38: #{tpu_custom_call.1} parent=5 // pred_check_branch
        %215 = sbr.rel (%p212) target = $region40
      $region39: #{tpu_custom_call.1} parent=5 // pred_region
        %s216 = ssub.s32 %s14, 1
        %s217 = smul.u32 2, %s24
        %p218 = scmp.lt.s32.totalorder %s23, 1
        %s219 = scalar_select %p218, %s23, 1
        %p220 = scmp.lt.s32.totalorder %s217, 1
        %s221 = scalar_select %p220, %s217, 1
        %s222 = smul.addr %s219, 2
        %s223 = sadd.s32 %s221, %s222
        %s224 = smul.addr %s223, 4
        %s225 = scalar_lea.vmem %s0, %s224
        %p226 = pneg %p54
        %p227 = pneg %p51
        %p228 = pneg %p75
        %p229 = pneg %p72
        %p230 = pneg %p96
        %p231 = pneg %p93
        %p232 = pneg %p117
        %p233 = pneg %p114
        %p234 = pneg %p138
        %p235 = pneg %p135
        %p236 = pneg %p166
        %p237 = pneg %p163
        %s238 = sand.u32 %s153, 1
        %s239 = scalar_lea.sflag [#allocation3], %s238
        %s240 = sand.u32 %s153, 1
        %s241 = smul.addr %s240, 8
        %s242 = scalar_lea.vmem [#allocation2], %s241
        %s243 = smul.u32 2, %s24
        %p244 = scmp.lt.s32.totalorder %s23, 1
        %s245 = scalar_select %p244, %s23, 1
        %p246 = scmp.lt.s32.totalorder %s243, 1
        %s247 = scalar_select %p246, %s243, 1
        %s248 = smul.addr %s245, 2
        %s249 = sadd.s32 %s247, %s248
        %s250 = smul.addr %s249, 4
        %s251 = scalar_lea.vmem %s0, %s250
        %s252 = smul.u32 2, %s24
        %s253 = smul.u32 2, %s24
        %v254 = vld [vmem:[%s1] sm:$0xff]
        %v255 = vld [vmem:[%s2] sm:$0xff]
        %v256 = vld [vmem:[%s3] sm:$0xf]
        %v257 = vld [vmem:[%s4] sm:$0xf]
        %v258 = vld [vmem:[%s251] sm:$0xff]
        %260 = vset.pattern.permute.xlu0 0
        %261 = vperm.xlu0 %260, %v255
        %v262 = vpop.permute.xlu0 %261
        %265 = vst [vmem:[#allocation1] ss:$2 sm:$0xff] %v258
        %v266 = vld.sshfl [vmem:[#allocation1] sm:$0xff pattern:$0x75316420]
        %v267 = vld.sshfl [vmem:[#allocation1 + $0x8] sm:$0xff pattern:$0x75316420]
        %vm268 = vcmask 31744
        %v270 = vsel %vm268, %v254, 0
        %vm272 = vcmask 1043456
        %v273 = vsel %vm272, %v266, 0
        %v275 = vsel %vm272, %v267, 0
        %277 = vmatpush.msra.mxu0 0.0
        %278 = vmatpush.msra.mxu0 0.0
        %279 = vmatpush.msra.mxu0 0.0
        %280 = vmatpush.msra.mxu0 0.0
        %281 = vmatpush.msra.mxu0 0.0
        %282 = vmatpush.msra.mxu0 0.0
        %283 = vmatpush.msra.mxu0 0.0
        %284 = vmatpush.msra.mxu0 0.0
        %285 = vmatpush.msra.mxu0 0.0
        %286 = vmatpush.msra.mxu0 0.0
        %287 = vmatpush.msra.mxu0 0.0
        %288 = vmatpush.msra.mxu0 0.0
        %289 = vmatpush.msra.mxu0 0.0
        %290 = vmatpush.msra.mxu0 0.0
        %291 = vmatpush.msra.mxu0 0.0
        %292 = vmatpush.msra.mxu0 %v273
        %293 = vmatmul.f32.gmra.mxu0 %v270
        %v294 = vpop.f32.mrf.mxu0
        %v295 = vadd.f32 %v262, %v294
        %296 = vdwg.mxu0
        %297 = vmatpush.msra.mxu0 0.0
        %298 = vmatpush.msra.mxu0 0.0
        %299 = vmatpush.msra.mxu0 0.0
        %300 = vmatpush.msra.mxu0 0.0
        %301 = vmatpush.msra.mxu0 0.0
        %302 = vmatpush.msra.mxu0 0.0
        %303 = vmatpush.msra.mxu0 0.0
        %304 = vmatpush.msra.mxu0 0.0
        %305 = vmatpush.msra.mxu0 0.0
        %306 = vmatpush.msra.mxu0 0.0
        %307 = vmatpush.msra.mxu0 0.0
        %308 = vmatpush.msra.mxu0 0.0
        %309 = vmatpush.msra.mxu0 0.0
        %310 = vmatpush.msra.mxu0 0.0
        %311 = vmatpush.msra.mxu0 0.0
        %312 = vmatpush.msra.mxu0 %v275
        %313 = vmatmul.f32.gmra.mxu0 %v270
        %v314 = vpop.f32.mrf.mxu0
        %v315 = vadd.f32 %v262, %v314
        %316 = vdwg.mxu0
        %v317 = vmax.f32 %v295, 0.0
        %v318 = vmax.f32 %v315, 0.0
        %320 = vset.pattern.permute.xlu0 0
        %321 = vperm.xlu0 %320, %v257
        %v322 = vpop.permute.xlu0 %321
        %vm324 = vcmask 64512
        %v326 = vsel %vm324, %v256, 0
        %328 = vmatpush.msra.mxu0 0.0
        %329 = vmatpush.msra.mxu0 0.0
        %330 = vmatpush.msra.mxu0 0.0
        %331 = vmatpush.msra.mxu0 0.0
        %332 = vmatpush.msra.mxu0 0.0
        %333 = vmatpush.msra.mxu0 0.0
        %334 = vmatpush.msra.mxu0 0.0
        %335 = vmatpush.msra.mxu0 0.0
        %336 = vmatpush.msra.mxu0 0.0
        %337 = vmatpush.msra.mxu0 0.0
        %338 = vmatpush.msra.mxu0 0.0
        %339 = vmatpush.msra.mxu0 0.0
        %340 = vmatpush.msra.mxu0 0.0
        %341 = vmatpush.msra.mxu0 0.0
        %342 = vmatpush.msra.mxu0 0.0
        %343 = vmatpush.msra.mxu0 %v317
        %344 = vmatmul.f32.gmra.mxu0 %v326
        %v345 = vpop.f32.mrf.mxu0
        %v346 = vadd.f32 %v322, %v345
        %347 = vdwg.mxu0
        %348 = vmatpush.msra.mxu0 0.0
        %349 = vmatpush.msra.mxu0 0.0
        %350 = vmatpush.msra.mxu0 0.0
        %351 = vmatpush.msra.mxu0 0.0
        %352 = vmatpush.msra.mxu0 0.0
        %353 = vmatpush.msra.mxu0 0.0
        %354 = vmatpush.msra.mxu0 0.0
        %355 = vmatpush.msra.mxu0 0.0
        %356 = vmatpush.msra.mxu0 0.0
        %357 = vmatpush.msra.mxu0 0.0
        %358 = vmatpush.msra.mxu0 0.0
        %359 = vmatpush.msra.mxu0 0.0
        %360 = vmatpush.msra.mxu0 0.0
        %361 = vmatpush.msra.mxu0 0.0
        %362 = vmatpush.msra.mxu0 0.0
        %363 = vmatpush.msra.mxu0 %v318
        %364 = vmatmul.f32.gmra.mxu0 %v326
        %v365 = vpop.f32.mrf.mxu0
        %v366 = vadd.f32 %v322, %v365
        %367 = vdwg.mxu0
        %v368 = vmax.f32 %v346, 0.0
        %v369 = vmax.f32 %v366, 0.0
        %v372 = vrot.slane %v369, 4
        %v373 = vsel %vm272, %v368, %v372
        %375 = vst [vmem:[%s242] sm:$0xff] %v373
        %s376 = sand.u32 %s153, 1
        %s377 = scalar_lea.sflag [#allocation3], %s376
        %s378 = sand.u32 %s153, 1
        %s379 = smul.addr %s378, 8
        %s380 = scalar_lea.vmem [#allocation2], %s379
        // Predicated region
        $region41: #{tpu_custom_call.1} parent=39 // pred_check
          %p381 = pneg %p163
        $region42: #{tpu_custom_call.1} parent=39 // pred_check_branch
          %383 = sbr.rel (%p381) target = $region44
        $region43: #{tpu_custom_call.1} parent=39 // pred_region
          %s384 = smul.u32 2, %s24
          %386 = vsyncadd %s377, 0
          %s387 = smul.addr %s23, 2
          %s388 = sadd.s32 %s384, %s387
          %s389 = smul.addr %s388, 4
          %s390 = scalar_lea.hbm %s5, %s389
          %s392 = sshll.u32 %s380, 4
          %s393 = int_to_ptr.vmem [resolvable:$true] %s392
          %s394 = sshll.u32 %s390, 4
          %s395 = int_to_ptr.hbm [resolvable:$true] %s394
          %397 = dma.vmem_to_hbm [thread:$0]  %s393, 128, %s395, %s377
        $region44: #{tpu_custom_call.1} parent=39 // pred_fallthru
          _
      $region40: #{tpu_custom_call.1} parent=5 // pred_fallthru
        _
      %p398 = scmp.le.s32.totalorder 2, %s14
      // Predicated region
      $region45: #{tpu_custom_call.1} parent=5 // pred_check
        %p399 = pneg %p398
      $region46: #{tpu_custom_call.1} parent=5 // pred_check_branch
        %401 = sbr.rel (%p399) target = $region48
      $region47: #{tpu_custom_call.1} parent=5 // pred_region
        %s402 = ssub.s32 %s14, 2
        // Predicated region
        $region49: #{tpu_custom_call.1} parent=47 // pred_check
          %p403 = pneg %p169
        $region50: #{tpu_custom_call.1} parent=47 // pred_check_branch
          %405 = sbr.rel (%p403) target = $region52
        $region51: #{tpu_custom_call.1} parent=47 // pred_region
          %s406 = sand.u32 %s154, 1
          %s407 = scalar_lea.sflag [#allocation3], %s406
          %s408 = sand.u32 %s154, 1
          %s409 = smul.addr %s408, 8
          %s410 = scalar_lea.vmem [#allocation2], %s409
          %412 = dma.done %s407, 128
        $region52: #{tpu_custom_call.1} parent=47 // pred_fallthru
          _
      $region48: #{tpu_custom_call.1} parent=5 // pred_fallthru
        _
    $region6: #{tpu_custom_call.1} parent=1 // loop_footer
      %s18 = sadd.s32 1, %s14
    $region7: #{tpu_custom_call.1} parent=1 // loop_footer_branch
      %13 = sbr.rel target = $region3
    $region8: #{tpu_custom_call.1} parent=1 // loop_exit
      _
    %413 = vsyncpa [#allocation3], 1
    %s414 = scalar_lea.sflag [#allocation3], 1
    %415 = vsyncpa %s414, 1

</llo_original>
